<compile_context>
chip_gen: v5e
topology: v5e:2x2
jax: 0.10.0
libtpu: 0.0.40
codegen_flags: <defaults>
</compile_context>

<pallas_src>
import functools

import jax
import jax.numpy as jnp
import numpy as np
from jax import lax
from jax.experimental import pallas as pl
from jax.experimental.pallas import tpu as pltpu

GEM_EPS = 1e-6   # GeM default eps
BN_EPS = 1e-5    # torch.nn.BatchNorm1d default eps


def _sigmoid(x):
    return 1.0 / (1.0 + jnp.exp(-x))


def _round_up(v, m):
    return ((v + m - 1) // m) * m


def head_kernel(x_ref, w1_ref, b1_ref, w2_ref, b2_ref, out_ref, *, C, HW, chunk, p, int_p):
    """One batch tile. x_ref is (TB, C*HW): channel c occupies lanes [c*HW, (c+1)*HW)."""
    TB = x_ref.shape[0]
    n_full = HW // chunk
    rem = HW - n_full * chunk
    inv_hw = 1.0 / float(HW)

    def pow_p(v):
        if int_p is not None:
            # integer exponent (default p=3): pure VPU multiplies, no EUP transcendentals
            r = v
            for _ in range(int_p - 1):
                r = r * v
            return r
        return jnp.exp(p * jnp.log(v))            # v > 0 (clamped), log is safe

    def chunk_sum(start, size):
        xx = x_ref[:, pl.ds(start, size)].astype(jnp.float32)
        xx = jnp.maximum(xx, GEM_EPS)             # clamp(min=eps)
        return jnp.sum(pow_p(xx), axis=-1, keepdims=True)      # (TB, 1)

    w1_all = w1_ref[...]                          # (C, hidden), tiny; load once
    h1 = None
    for c in range(C):                            # C is small and static
        base = c * HW
        s = jnp.zeros((TB, 1), jnp.float32)
        if n_full <= 16:
            # static chunk starts -> best codegen, no full-tile temporaries
            for k in range(n_full):
                s = s + chunk_sum(base + k * chunk, chunk)
        else:
            aligned = (chunk % 128 == 0) and (base % 128 == 0)

            def body(k, acc, _base=base, _aligned=aligned):
                start = _base + k * chunk
                if _aligned:
                    start = pl.multiple_of(start, 128)
                return acc + chunk_sum(start, chunk)

            s = lax.fori_loop(0, n_full, body, s)
        if rem:
            s = s + chunk_sum(base + n_full * chunk, rem)

        m = s * inv_hw                            # GeM: mean of clamped^p over HW
        if int_p == 1:
            g = m
        else:
            g = jnp.exp(jnp.log(m) * (1.0 / p))   # mean ** (1/p);  m >= eps^p > 0
        gs = g * _sigmoid(g)                      # Swish of the pooled channel value

        # BN1-folded Linear1 distributed over channels (K = C is tiny; VPU broadcast,
        # no reshape/regroup, no MXU pass with K=4).
        contrib = gs * w1_all[c:c + 1, :]         # (TB,1)*(1,hidden) -> (TB,hidden)
        h1 = contrib if h1 is None else h1 + contrib

    # TODO(synk): Dropout(p=0.5) train-mode stochastic masking not implemented (eval identity).
    h1 = h1 + b1_ref[...]
    h1 = h1 * _sigmoid(h1)                        # Swish

    # BN2-folded Linear2: bf16 operands on the MXU, f32 accumulation, lane-padded output.
    out = jnp.dot(h1.astype(w2_ref.dtype), w2_ref[...],
                  preferred_element_type=jnp.float32) + b2_ref[...]
    out_ref[...] = out.astype(out_ref.dtype)


def _fold_bn_into_linear(gamma, beta, mean, var, w, b):
    """Inference-time fold of BatchNorm1d (running stats) into the following Linear."""
    a = gamma * jax.lax.rsqrt(var + BN_EPS)       # (1, in)
    w_f = w * a.reshape(-1, 1)                    # (in, out)
    b_f = b + (beta - mean * a) @ w               # (1, out)
    return w_f, b_f


def _vmem_capacity_bytes():
    """Per-core VMEM capacity; conservative 64 MiB fallback (safe on every generation)."""
    try:
        info = pltpu.get_tpu_info()
        cap = int(getattr(info, "vmem_capacity_bytes", 0) or 0)
        if cap > 0:
            return cap
    except Exception:
        pass
    return 64 * 2 ** 20


def head_forward(x_nchw, params):
    B, C, H, W = x_nchw.shape
    HW = H * W
    CW = C * HW
    # Free, contiguous reshape: batch rows in sublanes, channel-major spatial in lanes.
    x = x_nchw.reshape(B, CW)                     # keep native dtype for the HBM->VMEM DMA

    # ---- static GeM exponent (concrete at wrapper time); specialise small integer p ----
    p_val = float(np.asarray(params["p"]).reshape(-1)[0])
    r = round(p_val)
    int_p = int(r) if (abs(p_val - r) < 1e-6 and 1 <= r <= 8) else None

    # ---- fold the BatchNorms into the Linears (inference running stats) ----
    w1f, b1f = _fold_bn_into_linear(params["bn1_gamma"], params["bn1_beta"],
                                    params["bn1_mean"], params["bn1_var"],
                                    params["w1"].astype(jnp.float32),
                                    params["b1"].astype(jnp.float32))
    w2f, b2f = _fold_bn_into_linear(params["bn2_gamma"], params["bn2_beta"],
                                    params["bn2_mean"], params["bn2_var"],
                                    params["w2"].astype(jnp.float32),
                                    params["b2"].astype(jnp.float32))
    hidden = w1f.shape[1]

    # ---- lane-pad the (tiny) output dim to a multiple of 128 with zeros ----
    n_out = w2f.shape[1]
    n_pad = _round_up(n_out, 128)
    if n_pad != n_out:
        w2f = jnp.pad(w2f, ((0, 0), (0, n_pad - n_out)))
        b2f = jnp.pad(b2f, ((0, 0), (0, n_pad - n_out)))
    w2bf = w2f.astype(jnp.bfloat16)               # MXU operand; accumulation stays f32

    # ---- generation-aware tiling & honest (physical) VMEM budget ----
    x_itemsize = x.dtype.itemsize
    sub = max(8, 32 // max(x_itemsize, 1))        # sublane packing granularity of x dtype
    chunk = min(HW, 512)
    cw_pad = _round_up(CW, 128)                   # lane padding of the x tile
    row_x_phys = cw_pad * x_itemsize              # physical VMEM bytes per batch row of x
    per_row = (2 * row_x_phys                     # double-buffered x tile
               + 2 * n_pad * 4                    # double-buffered out tile
               + 3 * chunk * 4                    # GeM chunk temporaries (f32)
               + hidden * 6 + n_pad * 4)          # h1 f32 + bf16 copy + out f32 temp
    c_pad = _round_up(C, 8)
    weight_bytes = 2 * (c_pad * hidden * 4 + 8 * hidden * 4      # w1f, b1f (sublane-padded)
                        + hidden * n_pad * 2 + 8 * n_pad * 4)    # w2 bf16, b2f
    fixed = 2 * 2 ** 20                           # internal scratch / semaphores headroom

    cap = _vmem_capacity_bytes()
    limit_cap = min(int(0.45 * cap), 56 * 2 ** 20)          # ~28 MiB on v7x, ~56 MiB v5e/v6e
    xbuf_target = 4 * 2 ** 20 if cap <= 80 * 2 ** 20 else 8 * 2 ** 20

    b_pad = _round_up(B, sub)
    tb = min(max(xbuf_target // max(row_x_phys, 1), 1),
             max((limit_cap - weight_bytes - fixed) // max(per_row, 1), 1),
             b_pad)
    tb = max(sub, (tb // sub) * sub)              # sublane alignment only (not 128)
    steps = pl.cdiv(b_pad, tb)
    if steps == 1 and b_pad >= 2 * sub:
        tb = _round_up(pl.cdiv(b_pad, 2), sub)    # keep both v7x TensorCores busy
        steps = pl.cdiv(b_pad, tb)
    Bp = steps * tb
    if Bp != B:
        x = jnp.pad(x, ((0, Bp - B), (0, 0)))

    vmem_limit = int(min(max(per_row * tb + weight_bytes + fixed, 16 * 2 ** 20),
                         max(int(0.9 * cap), 24 * 2 ** 20)))

    out = pl.pallas_call(
        functools.partial(head_kernel, C=C, HW=HW, chunk=chunk, p=p_val, int_p=int_p),
        out_shape=jax.ShapeDtypeStruct((Bp, n_pad), jnp.float32),
        grid_spec=pltpu.PrefetchScalarGridSpec(
            num_scalar_prefetch=0,
            grid=(steps,),
            in_specs=[
                pl.BlockSpec((tb, CW), lambda i: (i, 0)),        # x: batch-tiled, pipelined
                pl.BlockSpec((C, hidden), lambda i: (0, 0)),     # folded w1 (resident)
                pl.BlockSpec((1, hidden), lambda i: (0, 0)),     # folded b1
                pl.BlockSpec((hidden, n_pad), lambda i: (0, 0)), # folded, bf16, lane-padded w2
                pl.BlockSpec((1, n_pad), lambda i: (0, 0)),      # folded, lane-padded b2
            ],
            out_specs=pl.BlockSpec((tb, n_pad), lambda i: (i, 0)),
        ),
        compiler_params=pltpu.CompilerParams(
            dimension_semantics=("parallel",),    # batch tiles across TCs (v7x megacore)
            vmem_limit_bytes=vmem_limit,
        ),
    )(x, w1f, b1f, w2bf, b2f)

    return out[:B, :n_out]


def head_reference(x_nchw, params):
    """Pure-JAX reference of the same forward pass (for correctness check)."""
    p = params["p"][0]
    xc = jnp.clip(x_nchw, GEM_EPS, None)
    pooled = jnp.mean(xc ** p, axis=(2, 3))
    gem_out = pooled ** (1.0 / p)
    h = gem_out * jax.nn.sigmoid(gem_out)
    h = (h - params["bn1_mean"]) / jnp.sqrt(params["bn1_var"] + BN_EPS) * params["bn1_gamma"] + params["bn1_beta"]
    h = h @ params["w1"] + params["b1"]
    h = h * jax.nn.sigmoid(h)
    h = (h - params["bn2_mean"]) / jnp.sqrt(params["bn2_var"] + BN_EPS) * params["bn2_gamma"] + params["bn2_beta"]
    return h @ params["w2"] + params["b2"]


def make_params(key, nc2, hidden, n_out):
    ks = jax.random.split(key, 10)
    f32 = jnp.float32
    return {
        "p":         jnp.ones((1,), f32) * 3.0,                                    # GeM exponent
        "bn1_gamma": 1.0 + 0.1 * jax.random.normal(ks[0], (1, nc2), f32),
        "bn1_beta":  0.1 * jax.random.normal(ks[1], (1, nc2), f32),
        "bn1_mean":  0.1 * jax.random.normal(ks[2], (1, nc2), f32),
        "bn1_var":   0.5 + jnp.abs(jax.random.normal(ks[3], (1, nc2), f32)),
        "w1":        0.1 * jax.random.normal(ks[4], (nc2, hidden), f32),           # (in, out)
        "b1":        0.1 * jax.random.normal(ks[5], (1, hidden), f32),
        "bn2_gamma": 1.0 + 0.1 * jax.random.normal(ks[6], (1, hidden), f32),
        "bn2_beta":  0.1 * jax.random.normal(ks[7], (1, hidden), f32),
        "bn2_mean":  0.1 * jax.random.normal(ks[8], (1, hidden), f32),
        "bn2_var":   0.5 + jnp.abs(jax.random.normal(ks[9], (1, hidden), f32)),
        "w2":        0.1 * jax.random.normal(jax.random.PRNGKey(123), (hidden, n_out), f32),
        "b2":        0.1 * jax.random.normal(jax.random.PRNGKey(456), (1, n_out), f32),
    }


if __name__ == "__main__":
    # Head(nc=2, n=8) applied to a 4-channel (= nc*2) input.
    B, nc, H, W = 2, 2, 16, 16
    C = nc * 2
    hidden, n_out = 512, 8

    key = jax.random.PRNGKey(0)
    kx, kp = jax.random.split(key)
    x = jax.random.normal(kx, (B, C, H, W), jnp.float32)
    params = make_params(kp, C, hidden, n_out)

    out = head_forward(x, params)
    out = jax.block_until_ready(out)

    ref = head_reference(x, params)
    # bf16 weights on the second matmul (f32 accumulation) -> slightly loosened tolerance.
    np.testing.assert_allclose(np.asarray(out), np.asarray(ref), rtol=1e-2, atol=1e-2)
    assert out.shape == (B, n_out)
    print("KERNEL_OK")
</pallas_src>

<mosaic_0001>
module attributes {stable_mosaic.version = 11 : i64} {
  func.func @head_kernel(%arg0: i32, %arg1: memref<8x1024xf32, #tpu.memory_space<vmem>>, %arg2: memref<4x512xf32, #tpu.memory_space<vmem>>, %arg3: memref<1x512xf32, #tpu.memory_space<vmem>>, %arg4: memref<512x128xbf16, #tpu.memory_space<vmem>>, %arg5: memref<1x128xf32, #tpu.memory_space<vmem>>, %arg6: memref<8x128xf32, #tpu.memory_space<vmem>>) attributes {dimension_semantics = [#tpu.dimension_semantics<parallel>], iteration_bounds = array<i64: 1>, scalar_prefetch = 0 : i64, scratch_operands = 0 : i64, tpu.core_type = #tpu.core_type<tc>, window_params = [{transform_indices = @transform_0, window_bounds = array<i64: 8, 1024>}, {pipeline_mode = #tpu.pipeline_mode<synchronous>, transform_indices = @transform_1, window_bounds = array<i64: 4, 512>}, {pipeline_mode = #tpu.pipeline_mode<synchronous>, transform_indices = @transform_2, window_bounds = array<i64: 1, 512>}, {pipeline_mode = #tpu.pipeline_mode<synchronous>, transform_indices = @transform_3, window_bounds = array<i64: 512, 128>}, {pipeline_mode = #tpu.pipeline_mode<synchronous>, transform_indices = @transform_4, window_bounds = array<i64: 1, 128>}, {transform_indices = @transform_5, window_bounds = array<i64: 8, 128>}]} {
    %c0 = arith.constant 0 : index
    %c0_0 = arith.constant 0 : index
    %0 = vector.load %arg2[%c0, %c0_0] : memref<4x512xf32, #tpu.memory_space<vmem>>, vector<4x512xf32>
    %cst = arith.constant 0.000000e+00 : f32
    %1 = vector.broadcast %cst : f32 to vector<8x1xf32>
    %c0_1 = arith.constant 0 : index
    %c0_2 = arith.constant 0 : index
    %2 = vector.load %arg1[%c0_1, %c0_2] : memref<8x1024xf32, #tpu.memory_space<vmem>>, vector<8x256xf32>
    %cst_3 = arith.constant 9.99999997E-7 : f32
    %3 = vector.broadcast %cst_3 : f32 to vector<8x256xf32>
    %4 = arith.maximumf %2, %3 : vector<8x256xf32>
    %5 = arith.mulf %4, %4 : vector<8x256xf32>
    %6 = arith.mulf %5, %4 : vector<8x256xf32>
    %cst_4 = arith.constant dense<0.000000e+00> : vector<8xf32>
    %7 = vector.multi_reduction <add>, %6, %cst_4 [1] : vector<8x256xf32> to vector<8xf32>
    %8 = vector.shape_cast %7 : vector<8xf32> to vector<8x1xf32>
    %9 = arith.addf %1, %8 : vector<8x1xf32>
    %cst_5 = arith.constant 3.906250e-03 : f32
    %10 = vector.broadcast %cst_5 : f32 to vector<8x1xf32>
    %11 = arith.mulf %9, %10 : vector<8x1xf32>
    %12 = math.log %11 : vector<8x1xf32>
    %cst_6 = arith.constant 0.333333343 : f32
    %13 = vector.broadcast %cst_6 : f32 to vector<8x1xf32>
    %14 = arith.mulf %12, %13 : vector<8x1xf32>
    %15 = math.exp %14 : vector<8x1xf32>
    %cst_7 = arith.constant 0.000000e+00 : f32
    %16 = vector.broadcast %cst_7 : f32 to vector<8x1xf32>
    %17 = arith.subf %16, %15 : vector<8x1xf32>
    %18 = math.exp %17 : vector<8x1xf32>
    %cst_8 = arith.constant 1.000000e+00 : f32
    %19 = vector.broadcast %cst_8 : f32 to vector<8x1xf32>
    %20 = arith.addf %19, %18 : vector<8x1xf32>
    %cst_9 = arith.constant 1.000000e+00 : f32
    %21 = vector.broadcast %cst_9 : f32 to vector<8x1xf32>
    %22 = arith.divf %21, %20 : vector<8x1xf32>
    %23 = arith.mulf %15, %22 : vector<8x1xf32>
    %24 = vector.extract_strided_slice %0 {offsets = [0, 0], sizes = [1, 512], strides = [1, 1]} : vector<4x512xf32> to vector<1x512xf32>
    %25 = vector.broadcast %23 : vector<8x1xf32> to vector<8x512xf32>
    %26 = vector.broadcast %24 : vector<1x512xf32> to vector<8x512xf32>
    %27 = arith.mulf %25, %26 : vector<8x512xf32>
    %cst_10 = arith.constant 0.000000e+00 : f32
    %28 = vector.broadcast %cst_10 : f32 to vector<8x1xf32>
    %c0_11 = arith.constant 0 : index
    %c256 = arith.constant 256 : index
    %29 = vector.load %arg1[%c0_11, %c256] : memref<8x1024xf32, #tpu.memory_space<vmem>>, vector<8x256xf32>
    %cst_12 = arith.constant 9.99999997E-7 : f32
    %30 = vector.broadcast %cst_12 : f32 to vector<8x256xf32>
    %31 = arith.maximumf %29, %30 : vector<8x256xf32>
    %32 = arith.mulf %31, %31 : vector<8x256xf32>
    %33 = arith.mulf %32, %31 : vector<8x256xf32>
    %cst_13 = arith.constant dense<0.000000e+00> : vector<8xf32>
    %34 = vector.multi_reduction <add>, %33, %cst_13 [1] : vector<8x256xf32> to vector<8xf32>
    %35 = vector.shape_cast %34 : vector<8xf32> to vector<8x1xf32>
    %36 = arith.addf %28, %35 : vector<8x1xf32>
    %cst_14 = arith.constant 3.906250e-03 : f32
    %37 = vector.broadcast %cst_14 : f32 to vector<8x1xf32>
    %38 = arith.mulf %36, %37 : vector<8x1xf32>
    %39 = math.log %38 : vector<8x1xf32>
    %cst_15 = arith.constant 0.333333343 : f32
    %40 = vector.broadcast %cst_15 : f32 to vector<8x1xf32>
    %41 = arith.mulf %39, %40 : vector<8x1xf32>
    %42 = math.exp %41 : vector<8x1xf32>
    %cst_16 = arith.constant 0.000000e+00 : f32
    %43 = vector.broadcast %cst_16 : f32 to vector<8x1xf32>
    %44 = arith.subf %43, %42 : vector<8x1xf32>
    %45 = math.exp %44 : vector<8x1xf32>
    %cst_17 = arith.constant 1.000000e+00 : f32
    %46 = vector.broadcast %cst_17 : f32 to vector<8x1xf32>
    %47 = arith.addf %46, %45 : vector<8x1xf32>
    %cst_18 = arith.constant 1.000000e+00 : f32
    %48 = vector.broadcast %cst_18 : f32 to vector<8x1xf32>
    %49 = arith.divf %48, %47 : vector<8x1xf32>
    %50 = arith.mulf %42, %49 : vector<8x1xf32>
    %51 = vector.extract_strided_slice %0 {offsets = [1, 0], sizes = [1, 512], strides = [1, 1]} : vector<4x512xf32> to vector<1x512xf32>
    %52 = vector.broadcast %50 : vector<8x1xf32> to vector<8x512xf32>
    %53 = vector.broadcast %51 : vector<1x512xf32> to vector<8x512xf32>
    %54 = arith.mulf %52, %53 : vector<8x512xf32>
    %55 = arith.addf %27, %54 : vector<8x512xf32>
    %cst_19 = arith.constant 0.000000e+00 : f32
    %56 = vector.broadcast %cst_19 : f32 to vector<8x1xf32>
    %c0_20 = arith.constant 0 : index
    %c512 = arith.constant 512 : index
    %57 = vector.load %arg1[%c0_20, %c512] : memref<8x1024xf32, #tpu.memory_space<vmem>>, vector<8x256xf32>
    %cst_21 = arith.constant 9.99999997E-7 : f32
    %58 = vector.broadcast %cst_21 : f32 to vector<8x256xf32>
    %59 = arith.maximumf %57, %58 : vector<8x256xf32>
    %60 = arith.mulf %59, %59 : vector<8x256xf32>
    %61 = arith.mulf %60, %59 : vector<8x256xf32>
    %cst_22 = arith.constant dense<0.000000e+00> : vector<8xf32>
    %62 = vector.multi_reduction <add>, %61, %cst_22 [1] : vector<8x256xf32> to vector<8xf32>
    %63 = vector.shape_cast %62 : vector<8xf32> to vector<8x1xf32>
    %64 = arith.addf %56, %63 : vector<8x1xf32>
    %cst_23 = arith.constant 3.906250e-03 : f32
    %65 = vector.broadcast %cst_23 : f32 to vector<8x1xf32>
    %66 = arith.mulf %64, %65 : vector<8x1xf32>
    %67 = math.log %66 : vector<8x1xf32>
    %cst_24 = arith.constant 0.333333343 : f32
    %68 = vector.broadcast %cst_24 : f32 to vector<8x1xf32>
    %69 = arith.mulf %67, %68 : vector<8x1xf32>
    %70 = math.exp %69 : vector<8x1xf32>
    %cst_25 = arith.constant 0.000000e+00 : f32
    %71 = vector.broadcast %cst_25 : f32 to vector<8x1xf32>
    %72 = arith.subf %71, %70 : vector<8x1xf32>
    %73 = math.exp %72 : vector<8x1xf32>
    %cst_26 = arith.constant 1.000000e+00 : f32
    %74 = vector.broadcast %cst_26 : f32 to vector<8x1xf32>
    %75 = arith.addf %74, %73 : vector<8x1xf32>
    %cst_27 = arith.constant 1.000000e+00 : f32
    %76 = vector.broadcast %cst_27 : f32 to vector<8x1xf32>
    %77 = arith.divf %76, %75 : vector<8x1xf32>
    %78 = arith.mulf %70, %77 : vector<8x1xf32>
    %79 = vector.extract_strided_slice %0 {offsets = [2, 0], sizes = [1, 512], strides = [1, 1]} : vector<4x512xf32> to vector<1x512xf32>
    %80 = vector.broadcast %78 : vector<8x1xf32> to vector<8x512xf32>
    %81 = vector.broadcast %79 : vector<1x512xf32> to vector<8x512xf32>
    %82 = arith.mulf %80, %81 : vector<8x512xf32>
    %83 = arith.addf %55, %82 : vector<8x512xf32>
    %cst_28 = arith.constant 0.000000e+00 : f32
    %84 = vector.broadcast %cst_28 : f32 to vector<8x1xf32>
    %c0_29 = arith.constant 0 : index
    %c768 = arith.constant 768 : index
    %85 = vector.load %arg1[%c0_29, %c768] : memref<8x1024xf32, #tpu.memory_space<vmem>>, vector<8x256xf32>
    %cst_30 = arith.constant 9.99999997E-7 : f32
    %86 = vector.broadcast %cst_30 : f32 to vector<8x256xf32>
    %87 = arith.maximumf %85, %86 : vector<8x256xf32>
    %88 = arith.mulf %87, %87 : vector<8x256xf32>
    %89 = arith.mulf %88, %87 : vector<8x256xf32>
    %cst_31 = arith.constant dense<0.000000e+00> : vector<8xf32>
    %90 = vector.multi_reduction <add>, %89, %cst_31 [1] : vector<8x256xf32> to vector<8xf32>
    %91 = vector.shape_cast %90 : vector<8xf32> to vector<8x1xf32>
    %92 = arith.addf %84, %91 : vector<8x1xf32>
    %cst_32 = arith.constant 3.906250e-03 : f32
    %93 = vector.broadcast %cst_32 : f32 to vector<8x1xf32>
    %94 = arith.mulf %92, %93 : vector<8x1xf32>
    %95 = math.log %94 : vector<8x1xf32>
    %cst_33 = arith.constant 0.333333343 : f32
    %96 = vector.broadcast %cst_33 : f32 to vector<8x1xf32>
    %97 = arith.mulf %95, %96 : vector<8x1xf32>
    %98 = math.exp %97 : vector<8x1xf32>
    %cst_34 = arith.constant 0.000000e+00 : f32
    %99 = vector.broadcast %cst_34 : f32 to vector<8x1xf32>
    %100 = arith.subf %99, %98 : vector<8x1xf32>
    %101 = math.exp %100 : vector<8x1xf32>
    %cst_35 = arith.constant 1.000000e+00 : f32
    %102 = vector.broadcast %cst_35 : f32 to vector<8x1xf32>
    %103 = arith.addf %102, %101 : vector<8x1xf32>
    %cst_36 = arith.constant 1.000000e+00 : f32
    %104 = vector.broadcast %cst_36 : f32 to vector<8x1xf32>
    %105 = arith.divf %104, %103 : vector<8x1xf32>
    %106 = arith.mulf %98, %105 : vector<8x1xf32>
    %107 = vector.extract_strided_slice %0 {offsets = [3, 0], sizes = [1, 512], strides = [1, 1]} : vector<4x512xf32> to vector<1x512xf32>
    %108 = vector.broadcast %106 : vector<8x1xf32> to vector<8x512xf32>
    %109 = vector.broadcast %107 : vector<1x512xf32> to vector<8x512xf32>
    %110 = arith.mulf %108, %109 : vector<8x512xf32>
    %111 = arith.addf %83, %110 : vector<8x512xf32>
    %c0_37 = arith.constant 0 : index
    %c0_38 = arith.constant 0 : index
    %112 = vector.load %arg3[%c0_37, %c0_38] : memref<1x512xf32, #tpu.memory_space<vmem>>, vector<1x512xf32>
    %113 = vector.broadcast %112 : vector<1x512xf32> to vector<8x512xf32>
    %114 = arith.addf %111, %113 : vector<8x512xf32>
    %cst_39 = arith.constant 0.000000e+00 : f32
    %115 = vector.broadcast %cst_39 : f32 to vector<8x512xf32>
    %116 = arith.subf %115, %114 : vector<8x512xf32>
    %117 = math.exp %116 : vector<8x512xf32>
    %cst_40 = arith.constant 1.000000e+00 : f32
    %118 = vector.broadcast %cst_40 : f32 to vector<8x512xf32>
    %119 = arith.addf %118, %117 : vector<8x512xf32>
    %cst_41 = arith.constant 1.000000e+00 : f32
    %120 = vector.broadcast %cst_41 : f32 to vector<8x512xf32>
    %121 = arith.divf %120, %119 : vector<8x512xf32>
    %122 = arith.mulf %114, %121 : vector<8x512xf32>
    %123 = arith.truncf %122 : vector<8x512xf32> to vector<8x512xbf16>
    %c0_42 = arith.constant 0 : index
    %c0_43 = arith.constant 0 : index
    %124 = vector.load %arg4[%c0_42, %c0_43] : memref<512x128xbf16, #tpu.memory_space<vmem>>, vector<512x128xbf16>
    %cst_44 = arith.constant dense<0.000000e+00> : vector<8x128xf32>
    %125 = tpu.matmul %123, %124, %cst_44 {dimension_numbers = #tpu.dot_dimension_numbers<[1], [0], [0], [1], [0, 0, 1, 1], [], []>} : vector<8x512xbf16>, vector<512x128xbf16>, vector<8x128xf32> -> vector<8x128xf32>
    %c0_45 = arith.constant 0 : index
    %c0_46 = arith.constant 0 : index
    %126 = vector.load %arg5[%c0_45, %c0_46] : memref<1x128xf32, #tpu.memory_space<vmem>>, vector<1x128xf32>
    %127 = vector.broadcast %126 : vector<1x128xf32> to vector<8x128xf32>
    %128 = arith.addf %125, %127 : vector<8x128xf32>
    %c0_47 = arith.constant 0 : index
    %c0_48 = arith.constant 0 : index
    %129 = vector.load %arg6[%c0_47, %c0_48] : memref<8x128xf32, #tpu.memory_space<vmem>>, vector<8x128xf32>
    tpu.vector_store %arg6[%c0_47, %c0_48], %128 {strides = array<i32>} : memref<8x128xf32, #tpu.memory_space<vmem>>, vector<8x128xf32>,
    return
  }
  func.func @transform_0(%arg0: i32) -> (i32, i32) {
    %c0_i32 = arith.constant 0 : i32
    %c0_i32_0 = arith.constant 0 : i32
    return %arg0, %c0_i32 : i32, i32
  }
  func.func @transform_1(%arg0: i32) -> (i32, i32) {
    %c0_i32 = arith.constant 0 : i32
    %c0_i32_0 = arith.constant 0 : i32
    %c0_i32_1 = arith.constant 0 : i32
    return %c0_i32, %c0_i32_0 : i32, i32
  }
  func.func @transform_2(%arg0: i32) -> (i32, i32) {
    %c0_i32 = arith.constant 0 : i32
    %c0_i32_0 = arith.constant 0 : i32
    %c0_i32_1 = arith.constant 0 : i32
    return %c0_i32, %c0_i32_0 : i32, i32
  }
  func.func @transform_3(%arg0: i32) -> (i32, i32) {
    %c0_i32 = arith.constant 0 : i32
    %c0_i32_0 = arith.constant 0 : i32
    %c0_i32_1 = arith.constant 0 : i32
    return %c0_i32, %c0_i32_0 : i32, i32
  }
  func.func @transform_4(%arg0: i32) -> (i32, i32) {
    %c0_i32 = arith.constant 0 : i32
    %c0_i32_0 = arith.constant 0 : i32
    %c0_i32_1 = arith.constant 0 : i32
    return %c0_i32, %c0_i32_0 : i32, i32
  }
  func.func @transform_5(%arg0: i32) -> (i32, i32) {
    %c0_i32 = arith.constant 0 : i32
    %c0_i32_0 = arith.constant 0 : i32
    return %arg0, %c0_i32 : i32, i32
  }
}

</mosaic_0001>

<llo_original>
// kernel: tpu_custom_call.1
$region0: #{tpu_custom_call.1}
  #allocation0 [shape = 'u32[]', space=smem, size = 0x4, offset = 0x4, fixed_abs, tag = 'smem constant byte address 0x4 - core index']
  #allocation1 [shape = 'u32[72,128]{1,0:T(1,128)}', space=vmem, size = 0x9000, scoped, tag = 'internal scratch']
  %s0 = inlined_call_operand.hbm [shape: f32[8,1024], index: 0, kind: input, shape index: {}]
  %s1 = inlined_call_operand.hbm [shape: f32[4,512], index: 1, kind: input, shape index: {}]
  %s2 = inlined_call_operand.hbm [shape: f32[1,512], index: 2, kind: input, shape index: {}]
  %s3 = inlined_call_operand.hbm [shape: bf16[512,128], index: 3, kind: input, shape index: {}]
  %s4 = inlined_call_operand.vmem [shape: f32[1,128], index: 4, kind: input, shape index: {}]
  %s5 = inlined_call_operand.hbm [shape: f32[8,128], index: 5, kind: output, shape index: {}]
  %s6 = sld [smem:[#allocation0]]
  $region46: #{tpu_custom_call.1} parent=0
    _
  %s8 = ssub.s32 1, %s6
  %s9 = scalar_select 0, %s8, %s6
  $region1: #{tpu_custom_call.1} parent=0
    #allocation2 [shape = 'u8[32768]{0}', space=vmem, size = 0x8000, scoped, tag = 'input window, operand 0, single buffered']
    #allocation3 [shape = 's32[1]{0}', space=sflag, size = 0x4, scoped, tag = 'scoped memory for tpu_custom_call.1']
    #allocation4 [shape = 's32[1]{0}', space=sflag, size = 0x4, scoped, tag = 'scoped memory for tpu_custom_call.1']
    #allocation5 [shape = 'u8[8192]{0}', space=vmem, size = 0x2000, scoped, tag = 'input window, operand 1, single buffered']
    #allocation6 [shape = 's32[1]{0}', space=sflag, size = 0x4, scoped, tag = 'scoped memory for tpu_custom_call.1']
    #allocation7 [shape = 'u8[2048]{0}', space=vmem, size = 0x800, scoped, tag = 'input window, operand 2, single buffered']
    #allocation8 [shape = 'u8[131072]{0}', space=vmem, size = 0x20000, scoped, tag = 'input window, operand 3, single buffered']
    #allocation9 [shape = 's32[1]{0}', space=sflag, size = 0x4, scoped, tag = 'scoped memory for tpu_custom_call.1']
    #allocation10 [shape = 'u8[4096]{0}', space=vmem, size = 0x1000, scoped, tag = 'output window, operand 0, single buffered']
    %10 = vsyncpa [#allocation3], 0
    %11 = vsyncpa [#allocation6], 0
    %12 = vsyncpa [#allocation9], 0
    %13 = vsyncpa [#allocation4], 0
    // Predicated region
    $region2: #{tpu_custom_call.1} parent=1 // pred_check
      _
    $region3: #{tpu_custom_call.1} parent=1 // pred_check_branch
      %15 = sbr.rel (0) target = $region5
    $region4: #{tpu_custom_call.1} parent=1 // pred_region
      %17 = vsyncadd [#allocation3], 0
      %s19 = sshll.u32 %s0, 4
      %s20 = int_to_ptr.hbm [resolvable:$true] %s19
      %s21 = sshll.u32 [#allocation2], 4
      %s22 = int_to_ptr.vmem [resolvable:$true] %s21
      %24 = dma.hbm_to_vmem [thread:$0]  %s20, 1024, %s22, [#allocation3]
    $region5: #{tpu_custom_call.1} parent=1 // pred_fallthru
      _
    // Predicated region
    $region6: #{tpu_custom_call.1} parent=1 // pred_check
      _
    $region7: #{tpu_custom_call.1} parent=1 // pred_check_branch
      %26 = sbr.rel (0) target = $region9
    $region8: #{tpu_custom_call.1} parent=1 // pred_region
      %28 = vsyncadd [#allocation6], 0
      %s30 = sshll.u32 %s1, 4
      %s31 = int_to_ptr.hbm [resolvable:$true] %s30
      %s32 = sshll.u32 [#allocation5], 4
      %s33 = int_to_ptr.vmem [resolvable:$true] %s32
      %35 = dma.hbm_to_vmem [thread:$0]  %s31, 256, %s33, [#allocation6]
    $region9: #{tpu_custom_call.1} parent=1 // pred_fallthru
      _
    // Predicated region
    $region10: #{tpu_custom_call.1} parent=1 // pred_check
      _
    $region11: #{tpu_custom_call.1} parent=1 // pred_check_branch
      %37 = sbr.rel (0) target = $region13
    $region12: #{tpu_custom_call.1} parent=1 // pred_region
      %39 = vsyncadd [#allocation6], 0
      %s41 = sshll.u32 %s2, 4
      %s42 = int_to_ptr.hbm [resolvable:$true] %s41
      %s43 = sshll.u32 [#allocation7], 4
      %s44 = int_to_ptr.vmem [resolvable:$true] %s43
      %46 = dma.hbm_to_vmem [thread:$0]  %s42, 64, %s44, [#allocation6]
    $region13: #{tpu_custom_call.1} parent=1 // pred_fallthru
      _
    // Predicated region
    $region14: #{tpu_custom_call.1} parent=1 // pred_check
      _
    $region15: #{tpu_custom_call.1} parent=1 // pred_check_branch
      %48 = sbr.rel (0) target = $region17
    $region16: #{tpu_custom_call.1} parent=1 // pred_region
      %50 = vsyncadd [#allocation9], 0
      %s51 = sshll.u32 %s3, 4
      %s52 = int_to_ptr.hbm [resolvable:$true] %s51
      %s53 = sshll.u32 [#allocation8], 4
      %s54 = int_to_ptr.vmem [resolvable:$true] %s53
      %59 = dma.hbm_to_vmem [thread:$0]  %s52, 4096, %s54, [#allocation9], 64, 64, 4
    $region17: #{tpu_custom_call.1} parent=1 // pred_fallthru
      _
    // Predicated region
    $region18: #{tpu_custom_call.1} parent=1 // pred_check
      _
    $region19: #{tpu_custom_call.1} parent=1 // pred_check_branch
      %61 = sbr.rel (0) target = $region21
    $region20: #{tpu_custom_call.1} parent=1 // pred_region
      _
    $region21: #{tpu_custom_call.1} parent=1 // pred_fallthru
      _
    // Predicated region
    $region22: #{tpu_custom_call.1} parent=1 // pred_check
      _
    $region23: #{tpu_custom_call.1} parent=1 // pred_check_branch
      %63 = sbr.rel (0) target = $region25
    $region24: #{tpu_custom_call.1} parent=1 // pred_region
      %65 = dma.done [#allocation3], 1024
    $region25: #{tpu_custom_call.1} parent=1 // pred_fallthru
      _
    // Predicated region
    $region26: #{tpu_custom_call.1} parent=1 // pred_check
      _
    $region27: #{tpu_custom_call.1} parent=1 // pred_check_branch
      %67 = sbr.rel (0) target = $region29
    $region28: #{tpu_custom_call.1} parent=1 // pred_region
      %69 = dma.done [#allocation6], 256
    $region29: #{tpu_custom_call.1} parent=1 // pred_fallthru
      _
    // Predicated region
    $region30: #{tpu_custom_call.1} parent=1 // pred_check
      _
    $region31: #{tpu_custom_call.1} parent=1 // pred_check_branch
      %71 = sbr.rel (0) target = $region33
    $region32: #{tpu_custom_call.1} parent=1 // pred_region
      %73 = dma.done [#allocation6], 64
    $region33: #{tpu_custom_call.1} parent=1 // pred_fallthru
      _
    // Predicated region
    $region34: #{tpu_custom_call.1} parent=1 // pred_check
      _
    $region35: #{tpu_custom_call.1} parent=1 // pred_check_branch
      %75 = sbr.rel (0) target = $region37
    $region36: #{tpu_custom_call.1} parent=1 // pred_region
      %77 = dma.done [#allocation9], 4096
    $region37: #{tpu_custom_call.1} parent=1 // pred_fallthru
      _
    %v78 = vld [vmem:[#allocation5] sm:$0xff]
    %v79 = vld [vmem:[#allocation5 + $0x8] sm:$0xff]
    %v80 = vld [vmem:[#allocation2] sm:$0xff]
    %v81 = vld [vmem:[#allocation2 + $0x8] sm:$0xff]
    %v82 = vmax.f32 %v80, 1e-06
    %v83 = vmax.f32 %v81, 1e-06
    %v84 = vmul.f32 %v82, %v82
    %v85 = vmul.f32 %v83, %v83
    %v86 = vmul.f32 %v84, %v82
    %v87 = vmul.f32 %v85, %v83
    %v88 = vadd.f32 %v86, %v87
    %89 = vadd.xlane.f32.xlu0 %v88
    %v90 = vpop.xlane.xlu0 %89
    %v91 = vadd.f32 %v90, 0.0
    %v92 = vmul.f32 %v91, 0.00390625
    %v93 = vlog2.pop %v92
    %v94 = vmul.f32 %v93, 0.6931472
    %v95 = vmul.f32 %v94, 0.33333334
    %v96 = vmul.f32 %v95, 1.442695
    %v97 = vpow.pop %v96
    %v98 = vsub.f32 0.0, %v97
    %v99 = vmul.f32 %v98, 1.442695
    %v100 = vpow.pop %v99
    %v101 = vadd.f32 %v100, 1.0
    %v102 = vrcp.pop %v101
    %v103 = vmul.f32 %v101, %v102
    %v104 = vsub.f32 1.0, %v103
    %v105 = vmul.f32 %v102, %v104
    %v106 = vadd.f32 %v102, %v105
    %vm107 = vweird.f32 %v101
    %vm108 = vweird.f32 %v102
    %vm109 = vmor %vm107, %vm108
    %v110 = vsel %vm109, %v102, %v106
    %v111 = vand.u32 2147483647, %v101
    %vm112 = vcmp.eq.f32.partialorder %v111, 8.507059e+37
    %v113 = vand.u32 %v101, 2147483648
    %v114 = vor.u32 1.1754944e-38, %v113
    %v115 = vsel %vm112, %v114, %v110
    %v116 = vmul.f32 1.0, %v115
    %v117 = vmul.f32 %v97, %v116
    %v120 = vperm.slane %v78, 0
    %v121 = vperm.slane %v78, 4
    %v122 = vperm.slane %v79, 0
    %v123 = vperm.slane %v79, 4
    %v128 = vperm.slane %v120, 0
    %v129 = vperm.slane %v121, 0
    %v130 = vperm.slane %v122, 0
    %v131 = vperm.slane %v123, 0
    %v132 = vmul.f32 %v117, %v128
    %v133 = vmul.f32 %v117, %v129
    %v134 = vmul.f32 %v117, %v130
    %v135 = vmul.f32 %v117, %v131
    %v136 = vld [vmem:[#allocation2 + $0x10] sm:$0xff]
    %v137 = vld [vmem:[#allocation2 + $0x18] sm:$0xff]
    %v138 = vmax.f32 %v136, 1e-06
    %v139 = vmax.f32 %v137, 1e-06
    %v140 = vmul.f32 %v138, %v138
    %v141 = vmul.f32 %v139, %v139
    %v142 = vmul.f32 %v140, %v138
    %v143 = vmul.f32 %v141, %v139
    %v144 = vadd.f32 %v142, %v143
    %145 = vadd.xlane.f32.xlu0 %v144
    %v146 = vpop.xlane.xlu0 %145
    %v147 = vadd.f32 %v146, 0.0
    %v148 = vmul.f32 %v147, 0.00390625
    %v149 = vlog2.pop %v148
    %v150 = vmul.f32 %v149, 0.6931472
    %v151 = vmul.f32 %v150, 0.33333334
    %v152 = vmul.f32 %v151, 1.442695
    %v153 = vpow.pop %v152
    %v154 = vsub.f32 0.0, %v153
    %v155 = vmul.f32 %v154, 1.442695
    %v156 = vpow.pop %v155
    %v157 = vadd.f32 %v156, 1.0
    %v158 = vrcp.pop %v157
    %v159 = vmul.f32 %v157, %v158
    %v160 = vsub.f32 1.0, %v159
    %v161 = vmul.f32 %v158, %v160
    %v162 = vadd.f32 %v158, %v161
    %vm163 = vweird.f32 %v157
    %vm164 = vweird.f32 %v158
    %vm165 = vmor %vm163, %vm164
    %v166 = vsel %vm165, %v158, %v162
    %v167 = vand.u32 2147483647, %v157
    %vm168 = vcmp.eq.f32.partialorder %v167, 8.507059e+37
    %v169 = vand.u32 %v157, 2147483648
    %v170 = vor.u32 1.1754944e-38, %v169
    %v171 = vsel %vm168, %v170, %v166
    %v172 = vmul.f32 1.0, %v171
    %v173 = vmul.f32 %v153, %v172
    %v174 = vperm.slane %v78, 1
    %v175 = vperm.slane %v78, 5
    %v176 = vperm.slane %v79, 1
    %v177 = vperm.slane %v79, 5
    %v182 = vperm.slane %v174, 1
    %v183 = vperm.slane %v175, 1
    %v184 = vperm.slane %v176, 1
    %v185 = vperm.slane %v177, 1
    %v186 = vmul.f32 %v173, %v182
    %v187 = vmul.f32 %v173, %v183
    %v188 = vmul.f32 %v173, %v184
    %v189 = vmul.f32 %v173, %v185
    %v190 = vadd.f32 %v132, %v186
    %v191 = vadd.f32 %v133, %v187
    %v192 = vadd.f32 %v134, %v188
    %v193 = vadd.f32 %v135, %v189
    %v194 = vld [vmem:[#allocation2 + $0x20] sm:$0xff]
    %v195 = vld [vmem:[#allocation2 + $0x28] sm:$0xff]
    %v196 = vmax.f32 %v194, 1e-06
    %v197 = vmax.f32 %v195, 1e-06
    %v198 = vmul.f32 %v196, %v196
    %v199 = vmul.f32 %v197, %v197
    %v200 = vmul.f32 %v198, %v196
    %v201 = vmul.f32 %v199, %v197
    %v202 = vadd.f32 %v200, %v201
    %203 = vadd.xlane.f32.xlu0 %v202
    %v204 = vpop.xlane.xlu0 %203
    %v205 = vadd.f32 %v204, 0.0
    %v206 = vmul.f32 %v205, 0.00390625
    %v207 = vlog2.pop %v206
    %v208 = vmul.f32 %v207, 0.6931472
    %v209 = vmul.f32 %v208, 0.33333334
    %v210 = vmul.f32 %v209, 1.442695
    %v211 = vpow.pop %v210
    %v212 = vsub.f32 0.0, %v211
    %v213 = vmul.f32 %v212, 1.442695
    %v214 = vpow.pop %v213
    %v215 = vadd.f32 %v214, 1.0
    %v216 = vrcp.pop %v215
    %v217 = vmul.f32 %v215, %v216
    %v218 = vsub.f32 1.0, %v217
    %v219 = vmul.f32 %v216, %v218
    %v220 = vadd.f32 %v216, %v219
    %vm221 = vweird.f32 %v215
    %vm222 = vweird.f32 %v216
    %vm223 = vmor %vm221, %vm222
    %v224 = vsel %vm223, %v216, %v220
    %v225 = vand.u32 2147483647, %v215
    %vm226 = vcmp.eq.f32.partialorder %v225, 8.507059e+37
    %v227 = vand.u32 %v215, 2147483648
    %v228 = vor.u32 1.1754944e-38, %v227
    %v229 = vsel %vm226, %v228, %v224
    %v230 = vmul.f32 1.0, %v229
    %v231 = vmul.f32 %v211, %v230
    %v232 = vperm.slane %v78, 2
    %v233 = vperm.slane %v78, 6
    %v234 = vperm.slane %v79, 2
    %v235 = vperm.slane %v79, 6
    %v240 = vperm.slane %v232, 2
    %v241 = vperm.slane %v233, 2
    %v242 = vperm.slane %v234, 2
    %v243 = vperm.slane %v235, 2
    %v244 = vmul.f32 %v231, %v240
    %v245 = vmul.f32 %v231, %v241
    %v246 = vmul.f32 %v231, %v242
    %v247 = vmul.f32 %v231, %v243
    %v248 = vadd.f32 %v190, %v244
    %v249 = vadd.f32 %v191, %v245
    %v250 = vadd.f32 %v192, %v246
    %v251 = vadd.f32 %v193, %v247
    %v252 = vld [vmem:[#allocation2 + $0x30] sm:$0xff]
    %v253 = vld [vmem:[#allocation2 + $0x38] sm:$0xff]
    %v254 = vmax.f32 %v252, 1e-06
    %v255 = vmax.f32 %v253, 1e-06
    %v256 = vmul.f32 %v254, %v254
    %v257 = vmul.f32 %v255, %v255
    %v258 = vmul.f32 %v256, %v254
    %v259 = vmul.f32 %v257, %v255
    %v260 = vadd.f32 %v258, %v259
    %261 = vadd.xlane.f32.xlu0 %v260
    %v262 = vpop.xlane.xlu0 %261
    %v263 = vadd.f32 %v262, 0.0
    %v264 = vmul.f32 %v263, 0.00390625
    %v265 = vlog2.pop %v264
    %v266 = vmul.f32 %v265, 0.6931472
    %v267 = vmul.f32 %v266, 0.33333334
    %v268 = vmul.f32 %v267, 1.442695
    %v269 = vpow.pop %v268
    %v270 = vsub.f32 0.0, %v269
    %v271 = vmul.f32 %v270, 1.442695
    %v272 = vpow.pop %v271
    %v273 = vadd.f32 %v272, 1.0
    %v274 = vrcp.pop %v273
    %v275 = vmul.f32 %v273, %v274
    %v276 = vsub.f32 1.0, %v275
    %v277 = vmul.f32 %v274, %v276
    %v278 = vadd.f32 %v274, %v277
    %vm279 = vweird.f32 %v273
    %vm280 = vweird.f32 %v274
    %vm281 = vmor %vm279, %vm280
    %v282 = vsel %vm281, %v274, %v278
    %v283 = vand.u32 2147483647, %v273
    %vm284 = vcmp.eq.f32.partialorder %v283, 8.507059e+37
    %v285 = vand.u32 %v273, 2147483648
    %v286 = vor.u32 1.1754944e-38, %v285
    %v287 = vsel %vm284, %v286, %v282
    %v288 = vmul.f32 1.0, %v287
    %v289 = vmul.f32 %v269, %v288
    %v290 = vperm.slane %v78, 3
    %v291 = vperm.slane %v78, 7
    %v292 = vperm.slane %v79, 3
    %v293 = vperm.slane %v79, 7
    %v298 = vperm.slane %v290, 3
    %v299 = vperm.slane %v291, 3
    %v300 = vperm.slane %v292, 3
    %v301 = vperm.slane %v293, 3
    %v302 = vmul.f32 %v289, %v298
    %v303 = vmul.f32 %v289, %v299
    %v304 = vmul.f32 %v289, %v300
    %v305 = vmul.f32 %v289, %v301
    %v306 = vadd.f32 %v248, %v302
    %v307 = vadd.f32 %v249, %v303
    %v308 = vadd.f32 %v250, %v304
    %v309 = vadd.f32 %v251, %v305
    %v310 = vld [vmem:[#allocation7] sm:$0xf]
    %v312 = vperm.slane %v310, 0
    %v313 = vperm.slane %v310, 1
    %v314 = vperm.slane %v310, 2
    %v315 = vperm.slane %v310, 3
    %v320 = vadd.f32 %v306, %v312
    %v321 = vadd.f32 %v307, %v313
    %v322 = vadd.f32 %v308, %v314
    %v323 = vadd.f32 %v309, %v315
    %v324 = vsub.f32 0.0, %v320
    %v325 = vsub.f32 0.0, %v321
    %v326 = vsub.f32 0.0, %v322
    %v327 = vsub.f32 0.0, %v323
    %v328 = vmul.f32 %v324, 1.442695
    %v329 = vpow.pop %v328
    %v330 = vmul.f32 %v325, 1.442695
    %v331 = vpow.pop %v330
    %v332 = vmul.f32 %v326, 1.442695
    %v333 = vpow.pop %v332
    %v334 = vmul.f32 %v327, 1.442695
    %v335 = vpow.pop %v334
    %v336 = vadd.f32 %v329, 1.0
    %v337 = vadd.f32 %v331, 1.0
    %v338 = vadd.f32 %v333, 1.0
    %v339 = vadd.f32 %v335, 1.0
    %v340 = vrcp.pop %v336
    %v341 = vmul.f32 %v336, %v340
    %v342 = vsub.f32 1.0, %v341
    %v343 = vmul.f32 %v340, %v342
    %v344 = vadd.f32 %v340, %v343
    %vm345 = vweird.f32 %v336
    %vm346 = vweird.f32 %v340
    %vm347 = vmor %vm345, %vm346
    %v348 = vsel %vm347, %v340, %v344
    %v349 = vand.u32 2147483647, %v336
    %vm350 = vcmp.eq.f32.partialorder %v349, 8.507059e+37
    %v351 = vand.u32 %v336, 2147483648
    %v352 = vor.u32 1.1754944e-38, %v351
    %v353 = vsel %vm350, %v352, %v348
    %v354 = vmul.f32 1.0, %v353
    %v355 = vrcp.pop %v337
    %v356 = vmul.f32 %v337, %v355
    %v357 = vsub.f32 1.0, %v356
    %v358 = vmul.f32 %v355, %v357
    %v359 = vadd.f32 %v355, %v358
    %vm360 = vweird.f32 %v337
    %vm361 = vweird.f32 %v355
    %vm362 = vmor %vm360, %vm361
    %v363 = vsel %vm362, %v355, %v359
    %v364 = vand.u32 2147483647, %v337
    %vm365 = vcmp.eq.f32.partialorder %v364, 8.507059e+37
    %v366 = vand.u32 %v337, 2147483648
    %v367 = vor.u32 1.1754944e-38, %v366
    %v368 = vsel %vm365, %v367, %v363
    %v369 = vmul.f32 1.0, %v368
    %v370 = vrcp.pop %v338
    %v371 = vmul.f32 %v338, %v370
    %v372 = vsub.f32 1.0, %v371
    %v373 = vmul.f32 %v370, %v372
    %v374 = vadd.f32 %v370, %v373
    %vm375 = vweird.f32 %v338
    %vm376 = vweird.f32 %v370
    %vm377 = vmor %vm375, %vm376
    %v378 = vsel %vm377, %v370, %v374
    %v379 = vand.u32 2147483647, %v338
    %vm380 = vcmp.eq.f32.partialorder %v379, 8.507059e+37
    %v381 = vand.u32 %v338, 2147483648
    %v382 = vor.u32 1.1754944e-38, %v381
    %v383 = vsel %vm380, %v382, %v378
    %v384 = vmul.f32 1.0, %v383
    %v385 = vrcp.pop %v339
    %v386 = vmul.f32 %v339, %v385
    %v387 = vsub.f32 1.0, %v386
    %v388 = vmul.f32 %v385, %v387
    %v389 = vadd.f32 %v385, %v388
    %vm390 = vweird.f32 %v339
    %vm391 = vweird.f32 %v385
    %vm392 = vmor %vm390, %vm391
    %v393 = vsel %vm392, %v385, %v389
    %v394 = vand.u32 2147483647, %v339
    %vm395 = vcmp.eq.f32.partialorder %v394, 8.507059e+37
    %v396 = vand.u32 %v339, 2147483648
    %v397 = vor.u32 1.1754944e-38, %v396
    %v398 = vsel %vm395, %v397, %v393
    %v399 = vmul.f32 1.0, %v398
    %v400 = vmul.f32 %v320, %v354
    %v401 = vmul.f32 %v321, %v369
    %v402 = vmul.f32 %v322, %v384
    %v403 = vmul.f32 %v323, %v399
    %v404 = vpack.c.bf16 %v400, %v400
    %v405 = vpack.c.bf16 %v401, %v401
    %v406 = vpack.c.bf16 %v402, %v402
    %v407 = vpack.c.bf16 %v403, %v403
    %v408 = vld [vmem:[#allocation8] sm:$0xf]
    %v409 = vld [vmem:[#allocation8 + $0x4] sm:$0xf]
    %v410 = vld [vmem:[#allocation8 + $0x8] sm:$0xf]
    %v411 = vld [vmem:[#allocation8 + $0xc] sm:$0xf]
    %v412 = vld [vmem:[#allocation8 + $0x10] sm:$0xf]
    %v413 = vld [vmem:[#allocation8 + $0x14] sm:$0xf]
    %v414 = vld [vmem:[#allocation8 + $0x18] sm:$0xf]
    %v415 = vld [vmem:[#allocation8 + $0x1c] sm:$0xf]
    %v416 = vld [vmem:[#allocation8 + $0x20] sm:$0xf]
    %v417 = vld [vmem:[#allocation8 + $0x24] sm:$0xf]
    %v418 = vld [vmem:[#allocation8 + $0x28] sm:$0xf]
    %v419 = vld [vmem:[#allocation8 + $0x2c] sm:$0xf]
    %v420 = vld [vmem:[#allocation8 + $0x30] sm:$0xf]
    %v421 = vld [vmem:[#allocation8 + $0x34] sm:$0xf]
    %v422 = vld [vmem:[#allocation8 + $0x38] sm:$0xf]
    %v423 = vld [vmem:[#allocation8 + $0x3c] sm:$0xf]
    %v424 = vld [vmem:[#allocation8 + $0x40] sm:$0xf]
    %v425 = vld [vmem:[#allocation8 + $0x44] sm:$0xf]
    %v426 = vld [vmem:[#allocation8 + $0x48] sm:$0xf]
    %v427 = vld [vmem:[#allocation8 + $0x4c] sm:$0xf]
    %v428 = vld [vmem:[#allocation8 + $0x50] sm:$0xf]
    %v429 = vld [vmem:[#allocation8 + $0x54] sm:$0xf]
    %v430 = vld [vmem:[#allocation8 + $0x58] sm:$0xf]
    %v431 = vld [vmem:[#allocation8 + $0x5c] sm:$0xf]
    %v432 = vld [vmem:[#allocation8 + $0x60] sm:$0xf]
    %v433 = vld [vmem:[#allocation8 + $0x64] sm:$0xf]
    %v434 = vld [vmem:[#allocation8 + $0x68] sm:$0xf]
    %v435 = vld [vmem:[#allocation8 + $0x6c] sm:$0xf]
    %v436 = vld [vmem:[#allocation8 + $0x70] sm:$0xf]
    %v437 = vld [vmem:[#allocation8 + $0x74] sm:$0xf]
    %v438 = vld [vmem:[#allocation8 + $0x78] sm:$0xf]
    %v439 = vld [vmem:[#allocation8 + $0x7c] sm:$0xf]
    %v440 = vld [vmem:[#allocation8 + $0x80] sm:$0xf]
    %v441 = vld [vmem:[#allocation8 + $0x84] sm:$0xf]
    %v442 = vld [vmem:[#allocation8 + $0x88] sm:$0xf]
    %v443 = vld [vmem:[#allocation8 + $0x8c] sm:$0xf]
    %v444 = vld [vmem:[#allocation8 + $0x90] sm:$0xf]
    %v445 = vld [vmem:[#allocation8 + $0x94] sm:$0xf]
    %v446 = vld [vmem:[#allocation8 + $0x98] sm:$0xf]
    %v447 = vld [vmem:[#allocation8 + $0x9c] sm:$0xf]
    %v448 = vld [vmem:[#allocation8 + $0xa0] sm:$0xf]
    %v449 = vld [vmem:[#allocation8 + $0xa4] sm:$0xf]
    %v450 = vld [vmem:[#allocation8 + $0xa8] sm:$0xf]
    %v451 = vld [vmem:[#allocation8 + $0xac] sm:$0xf]
    %v452 = vld [vmem:[#allocation8 + $0xb0] sm:$0xf]
    %v453 = vld [vmem:[#allocation8 + $0xb4] sm:$0xf]
    %v454 = vld [vmem:[#allocation8 + $0xb8] sm:$0xf]
    %v455 = vld [vmem:[#allocation8 + $0xbc] sm:$0xf]
    %v456 = vld [vmem:[#allocation8 + $0xc0] sm:$0xf]
    %v457 = vld [vmem:[#allocation8 + $0xc4] sm:$0xf]
    %v458 = vld [vmem:[#allocation8 + $0xc8] sm:$0xf]
    %v459 = vld [vmem:[#allocation8 + $0xcc] sm:$0xf]
    %v460 = vld [vmem:[#allocation8 + $0xd0] sm:$0xf]
    %v461 = vld [vmem:[#allocation8 + $0xd4] sm:$0xf]
    %v462 = vld [vmem:[#allocation8 + $0xd8] sm:$0xf]
    %v463 = vld [vmem:[#allocation8 + $0xdc] sm:$0xf]
    %v464 = vld [vmem:[#allocation8 + $0xe0] sm:$0xf]
    %v465 = vld [vmem:[#allocation8 + $0xe4] sm:$0xf]
    %v466 = vld [vmem:[#allocation8 + $0xe8] sm:$0xf]
    %v467 = vld [vmem:[#allocation8 + $0xec] sm:$0xf]
    %v468 = vld [vmem:[#allocation8 + $0xf0] sm:$0xf]
    %v469 = vld [vmem:[#allocation8 + $0xf4] sm:$0xf]
    %v470 = vld [vmem:[#allocation8 + $0xf8] sm:$0xf]
    %v471 = vld [vmem:[#allocation8 + $0xfc] sm:$0xf]
    %v472 = vld [vmem:[%s4] sm:$0x1]
    %v474 = vperm.slane %v472, 0
    %v540 = vunpack.c.l.b16 %v408
    %v541 = vunpack.c.l.b16 %v409
    %v542 = vunpack.c.l.b16 %v410
    %v543 = vunpack.c.l.b16 %v411
    %v544 = vunpack.c.l.b16 %v412
    %v545 = vunpack.c.l.b16 %v413
    %v546 = vunpack.c.l.b16 %v414
    %v547 = vunpack.c.l.b16 %v415
    %v548 = vunpack.c.l.b16 %v416
    %v549 = vunpack.c.l.b16 %v417
    %v550 = vunpack.c.l.b16 %v418
    %v551 = vunpack.c.l.b16 %v419
    %v552 = vunpack.c.l.b16 %v420
    %v553 = vunpack.c.l.b16 %v421
    %v554 = vunpack.c.l.b16 %v422
    %v555 = vunpack.c.l.b16 %v423
    %v556 = vunpack.c.l.b16 %v424
    %v557 = vunpack.c.l.b16 %v425
    %v558 = vunpack.c.l.b16 %v426
    %v559 = vunpack.c.l.b16 %v427
    %v560 = vunpack.c.l.b16 %v428
    %v561 = vunpack.c.l.b16 %v429
    %v562 = vunpack.c.l.b16 %v430
    %v563 = vunpack.c.l.b16 %v431
    %v564 = vunpack.c.l.b16 %v432
    %v565 = vunpack.c.l.b16 %v433
    %v566 = vunpack.c.l.b16 %v434
    %v567 = vunpack.c.l.b16 %v435
    %v568 = vunpack.c.l.b16 %v436
    %v569 = vunpack.c.l.b16 %v437
    %v570 = vunpack.c.l.b16 %v438
    %v571 = vunpack.c.l.b16 %v439
    %v572 = vunpack.c.l.b16 %v440
    %v573 = vunpack.c.l.b16 %v441
    %v574 = vunpack.c.l.b16 %v442
    %v575 = vunpack.c.l.b16 %v443
    %v576 = vunpack.c.l.b16 %v444
    %v577 = vunpack.c.l.b16 %v445
    %v578 = vunpack.c.l.b16 %v446
    %v579 = vunpack.c.l.b16 %v447
    %v580 = vunpack.c.l.b16 %v448
    %v581 = vunpack.c.l.b16 %v449
    %v582 = vunpack.c.l.b16 %v450
    %v583 = vunpack.c.l.b16 %v451
    %v584 = vunpack.c.l.b16 %v452
    %v585 = vunpack.c.l.b16 %v453
    %v586 = vunpack.c.l.b16 %v454
    %v587 = vunpack.c.l.b16 %v455
    %v588 = vunpack.c.l.b16 %v456
    %v589 = vunpack.c.l.b16 %v457
    %v590 = vunpack.c.l.b16 %v458
    %v591 = vunpack.c.l.b16 %v459
    %v592 = vunpack.c.l.b16 %v460
    %v593 = vunpack.c.l.b16 %v461
    %v594 = vunpack.c.l.b16 %v462
    %v595 = vunpack.c.l.b16 %v463
    %v596 = vunpack.c.l.b16 %v464
    %v597 = vunpack.c.l.b16 %v465
    %v598 = vunpack.c.l.b16 %v466
    %v599 = vunpack.c.l.b16 %v467
    %v600 = vunpack.c.l.b16 %v468
    %v601 = vunpack.c.l.b16 %v469
    %v602 = vunpack.c.l.b16 %v470
    %v603 = vunpack.c.l.b16 %v471
    %v604 = vpack.c.b16 %v541, %v540
    %v605 = vpack.c.b16 %v543, %v542
    %v606 = vpack.c.b16 %v545, %v544
    %v607 = vpack.c.b16 %v547, %v546
    %v608 = vpack.c.b16 %v549, %v548
    %v609 = vpack.c.b16 %v551, %v550
    %v610 = vpack.c.b16 %v553, %v552
    %v611 = vpack.c.b16 %v555, %v554
    %v612 = vpack.c.b16 %v557, %v556
    %v613 = vpack.c.b16 %v559, %v558
    %v614 = vpack.c.b16 %v561, %v560
    %v615 = vpack.c.b16 %v563, %v562
    %v616 = vpack.c.b16 %v565, %v564
    %v617 = vpack.c.b16 %v567, %v566
    %v618 = vpack.c.b16 %v569, %v568
    %v619 = vpack.c.b16 %v571, %v570
    %v620 = vpack.c.b16 %v573, %v572
    %v621 = vpack.c.b16 %v575, %v574
    %v622 = vpack.c.b16 %v577, %v576
    %v623 = vpack.c.b16 %v579, %v578
    %v624 = vpack.c.b16 %v581, %v580
    %v625 = vpack.c.b16 %v583, %v582
    %v626 = vpack.c.b16 %v585, %v584
    %v627 = vpack.c.b16 %v587, %v586
    %v628 = vpack.c.b16 %v589, %v588
    %v629 = vpack.c.b16 %v591, %v590
    %v630 = vpack.c.b16 %v593, %v592
    %v631 = vpack.c.b16 %v595, %v594
    %v632 = vpack.c.b16 %v597, %v596
    %v633 = vpack.c.b16 %v599, %v598
    %v634 = vpack.c.b16 %v601, %v600
    %v635 = vpack.c.b16 %v603, %v602
    %668 = vmatpush.bf16.msra.mxu0 %v611
    %669 = vmatpush.bf16.msra.mxu0 %v610
    %670 = vmatpush.bf16.msra.mxu0 %v609
    %671 = vmatpush.bf16.msra.mxu0 %v608
    %672 = vmatpush.bf16.msra.mxu0 %v607
    %673 = vmatpush.bf16.msra.mxu0 %v606
    %674 = vmatpush.bf16.msra.mxu0 %v605
    %675 = vmatpush.bf16.msra.mxu0 %v604
    %676 = vmatmul.bf16.gmra.mxu0 %v404
    %v677 = vpop.f32.mrf.mxu0
    %v678 = vadd.f32 %v474, %v677
    %v679 = vpop.f32.mrf.mxu0
    %680 = vdwg.mxu0
    %681 = vmatpush.bf16.msra.mxu0 %v619
    %682 = vmatpush.bf16.msra.mxu0 %v618
    %683 = vmatpush.bf16.msra.mxu0 %v617
    %684 = vmatpush.bf16.msra.mxu0 %v616
    %685 = vmatpush.bf16.msra.mxu0 %v615
    %686 = vmatpush.bf16.msra.mxu0 %v614
    %687 = vmatpush.bf16.msra.mxu0 %v613
    %688 = vmatpush.bf16.msra.mxu0 %v612
    %689 = vmatmul.bf16.gmra.mxu0 %v405
    %v690 = vpop.f32.mrf.mxu0
    %v691 = vadd.f32 %v678, %v690
    %v692 = vpop.f32.mrf.mxu0
    %693 = vdwg.mxu0
    %694 = vmatpush.bf16.msra.mxu0 %v627
    %695 = vmatpush.bf16.msra.mxu0 %v626
    %696 = vmatpush.bf16.msra.mxu0 %v625
    %697 = vmatpush.bf16.msra.mxu0 %v624
    %698 = vmatpush.bf16.msra.mxu0 %v623
    %699 = vmatpush.bf16.msra.mxu0 %v622
    %700 = vmatpush.bf16.msra.mxu0 %v621
    %701 = vmatpush.bf16.msra.mxu0 %v620
    %702 = vmatmul.bf16.gmra.mxu0 %v406
    %v703 = vpop.f32.mrf.mxu0
    %v704 = vadd.f32 %v691, %v703
    %v705 = vpop.f32.mrf.mxu0
    %706 = vdwg.mxu0
    %707 = vmatpush.bf16.msra.mxu0 %v635
    %708 = vmatpush.bf16.msra.mxu0 %v634
    %709 = vmatpush.bf16.msra.mxu0 %v633
    %710 = vmatpush.bf16.msra.mxu0 %v632
    %711 = vmatpush.bf16.msra.mxu0 %v631
    %712 = vmatpush.bf16.msra.mxu0 %v630
    %713 = vmatpush.bf16.msra.mxu0 %v629
    %714 = vmatpush.bf16.msra.mxu0 %v628
    %715 = vmatmul.bf16.gmra.mxu0 %v407
    %v716 = vpop.f32.mrf.mxu0
    %v717 = vadd.f32 %v704, %v716
    %v718 = vpop.f32.mrf.mxu0
    %719 = vdwg.mxu0
    %720 = vst [vmem:[#allocation10] sm:$0xff] %v717
    // Predicated region
    $region38: #{tpu_custom_call.1} parent=1 // pred_check
      _
    $region39: #{tpu_custom_call.1} parent=1 // pred_check_branch
      %722 = sbr.rel (0) target = $region41
    $region40: #{tpu_custom_call.1} parent=1 // pred_region
      %724 = vsyncadd [#allocation4], 0
      %s726 = sshll.u32 [#allocation10], 4
      %s727 = int_to_ptr.vmem [resolvable:$true] %s726
      %s728 = sshll.u32 %s5, 4
      %s729 = int_to_ptr.hbm [resolvable:$true] %s728
      %731 = dma.vmem_to_hbm [thread:$0]  %s727, 128, %s729, [#allocation4]
    $region41: #{tpu_custom_call.1} parent=1 // pred_fallthru
      _
    // Predicated region
    $region42: #{tpu_custom_call.1} parent=1 // pred_check
      _
    $region43: #{tpu_custom_call.1} parent=1 // pred_check_branch
      %733 = sbr.rel (0) target = $region45
    $region44: #{tpu_custom_call.1} parent=1 // pred_region
      %735 = dma.done [#allocation4], 128
    $region45: #{tpu_custom_call.1} parent=1 // pred_fallthru
      _
    %736 = vsyncpa [#allocation3], 1
    %737 = vsyncpa [#allocation6], 1
    %738 = vsyncpa [#allocation9], 1
    %739 = vsyncpa [#allocation4], 1

</llo_original>
